<compile_context>
chip_gen: v5e
topology: v5e:2x2
jax: 0.10.0
libtpu: 0.0.40
codegen_flags: <defaults>
</compile_context>

<pallas_src>
import functools

import jax
import jax.numpy as jnp
from jax.experimental import pallas as pl
from jax.experimental.pallas import tpu as pltpu

H1 = 128      # fc1 output width
H2 = 64       # fc2 output width
LANE = 128    # TPU lane width


def _round_up(n, m):
    return ((n + m - 1) // m) * m


def _ppo_kernel(x_ref, w1_ref, b1_ref, w2_ref, b2_ref, wh_ref, bh_ref, out_ref):
    x = x_ref[...]

    # fc1 + relu  (K padded to 128, N = 128)
    h1 = jnp.dot(x, w1_ref[...], preferred_element_type=jnp.float32) + b1_ref[...]
    h1 = jnp.maximum(h1, 0.0)

    # fc2 + relu  (K = 128, N = 64)
    h2 = jnp.dot(h1, w2_ref[...], preferred_element_type=jnp.float32) + b2_ref[...]
    h2 = jnp.maximum(h2, 0.0)

    # fused actor+critic head, padded to 128 lanes -> single lane-dense store
    out_ref[...] = (
        jnp.dot(h2, wh_ref[...], preferred_element_type=jnp.float32) + bh_ref[...]
    )


@functools.partial(jax.jit, static_argnames=("block_batch",))
def ppo_forward(x, params, *, block_batch=1024):
    """Fused PPO forward. x: [B, input_dim] f32.

    Returns (logits [B, out_dim] f32, value [B, 1] f32).
    """
    w1, b1, w2, b2, wa, ba, wc, bc = params
    B, in_dim = x.shape
    out_dim = wa.shape[1]
    head_dim = out_dim + 1                       # actor logits + critic value

    in_pad = _round_up(max(in_dim, LANE), LANE)      # pad K of fc1 to 128
    head_pad = _round_up(max(head_dim, LANE), LANE)  # pad head N to 128

    # Batch tile: multiple of 8 sublanes, capped so double-buffered x/out tiles
    # plus h1/h2 intermediates stay far below VMEM on every generation
    # (block_batch=1024 -> ~3 MiB of VMEM, safe even on v7x's 64 MiB).
    tb = min(block_batch, _round_up(B, 8))
    b_pad = _round_up(B, tb)

    # --- wrapper-side layout plumbing (zeros cost nothing numerically) ------
    xp = jnp.zeros((b_pad, in_pad), jnp.float32).at[:B, :in_dim].set(x)
    w1p = jnp.zeros((in_pad, H1), jnp.float32).at[:in_dim, :].set(w1)

    # Fuse actor + critic into one (64, head_pad) weight / (1, head_pad) bias.
    wh = jnp.zeros((H2, head_pad), jnp.float32)
    wh = wh.at[:, :out_dim].set(wa).at[:, out_dim:head_dim].set(wc)
    bh = jnp.zeros((1, head_pad), jnp.float32)
    bh = bh.at[:, :out_dim].set(ba.reshape(1, -1))
    bh = bh.at[:, out_dim:head_dim].set(bc.reshape(1, -1))

    grid = (b_pad // tb,)

    # x / output tiled over the batch; weights & biases resident (block 0).
    x_spec = pl.BlockSpec((tb, in_pad), lambda i: (i, 0))
    w1_spec = pl.BlockSpec((in_pad, H1), lambda i: (0, 0))
    b1_spec = pl.BlockSpec((1, H1), lambda i: (0, 0))
    w2_spec = pl.BlockSpec((H1, H2), lambda i: (0, 0))
    b2_spec = pl.BlockSpec((1, H2), lambda i: (0, 0))
    wh_spec = pl.BlockSpec((H2, head_pad), lambda i: (0, 0))
    bh_spec = pl.BlockSpec((1, head_pad), lambda i: (0, 0))
    out_spec = pl.BlockSpec((tb, head_pad), lambda i: (i, 0))

    flops = 2 * b_pad * (in_pad * H1 + H1 * H2 + H2 * head_pad)
    bytes_accessed = 4 * (
        b_pad * in_pad            # x in
        + in_pad * H1 + H1        # fc1
        + H1 * H2 + H2            # fc2
        + H2 * head_pad + head_pad  # fused head
        + b_pad * head_pad        # out
    )

    out = pl.pallas_call(
        _ppo_kernel,
        out_shape=jax.ShapeDtypeStruct((b_pad, head_pad), jnp.float32),
        grid=grid,
        in_specs=[x_spec, w1_spec, b1_spec, w2_spec, b2_spec, wh_spec, bh_spec],
        out_specs=out_spec,
        compiler_params=pltpu.CompilerParams(
            dimension_semantics=("parallel",),
        ),
        cost_estimate=pl.CostEstimate(
            flops=flops, transcendentals=0, bytes_accessed=bytes_accessed
        ),
    )(xp, w1p, b1, w2, b2, wh, bh)

    logits = out[:B, :out_dim]
    value = out[:B, out_dim:head_dim]
    return logits, value


def init_ppo_params(key, input_dim, output_dim):
    """Deterministic parameter init (shapes match the PyTorch module, stored (in, out))."""
    ks = jax.random.split(key, 8)

    def lin(kw, kb, fan_in, fan_out):
        bound = 1.0 / jnp.sqrt(fan_in)
        w = jax.random.uniform(kw, (fan_in, fan_out), jnp.float32, -bound, bound)
        b = jax.random.uniform(kb, (1, fan_out), jnp.float32, -bound, bound)
        return w, b

    w1, b1 = lin(ks[0], ks[1], input_dim, H1)     # fc1
    w2, b2 = lin(ks[2], ks[3], H1, H2)            # fc2
    wa, ba = lin(ks[4], ks[5], H2, output_dim)    # actor
    wc, bc = lin(ks[6], ks[7], H2, 1)             # critic
    return (w1, b1, w2, b2, wa, ba, wc, bc)


def ppo_forward_ref(x, params):
    """Pure-JAX reference of the same forward pass."""
    w1, b1, w2, b2, wa, ba, wc, bc = params
    h1 = jnp.maximum(x @ w1 + b1, 0.0)
    h2 = jnp.maximum(h1 @ w2 + b2, 0.0)
    return h2 @ wa + ba, h2 @ wc + bc


if __name__ == "__main__":
    key = jax.random.PRNGKey(0)
    k_param, k_x = jax.random.split(key)

    batch, input_dim, output_dim = 8, 32, 4
    params = init_ppo_params(k_param, input_dim, output_dim)
    x = jax.random.normal(k_x, (batch, input_dim), jnp.float32)

    logits, value = ppo_forward(x, params)
    jax.block_until_ready((logits, value))

    logits_ref, value_ref = ppo_forward_ref(x, params)
    assert logits.shape == (batch, output_dim) and value.shape == (batch, 1)
    assert jnp.allclose(logits, logits_ref, atol=1e-4, rtol=1e-4)
    assert jnp.allclose(value, value_ref, atol=1e-4, rtol=1e-4)

    print("KERNEL_OK")
</pallas_src>

<mosaic_0001>
module attributes {stable_mosaic.version = 11 : i64} {
  func.func @_ppo_kernel(%arg0: i32, %arg1: memref<8x128xf32, #tpu.memory_space<vmem>>, %arg2: memref<128x128xf32, #tpu.memory_space<vmem>>, %arg3: memref<1x128xf32, #tpu.memory_space<vmem>>, %arg4: memref<128x64xf32, #tpu.memory_space<vmem>>, %arg5: memref<1x64xf32, #tpu.memory_space<vmem>>, %arg6: memref<64x128xf32, #tpu.memory_space<vmem>>, %arg7: memref<1x128xf32, #tpu.memory_space<vmem>>, %arg8: memref<8x128xf32, #tpu.memory_space<vmem>>) attributes {dimension_semantics = [#tpu.dimension_semantics<parallel>], iteration_bounds = array<i64: 1>, scalar_prefetch = 0 : i64, scratch_operands = 0 : i64, tpu.core_type = #tpu.core_type<tc>, window_params = [{transform_indices = @transform_0, window_bounds = array<i64: 8, 128>}, {pipeline_mode = #tpu.pipeline_mode<synchronous>, transform_indices = @transform_1, window_bounds = array<i64: 128, 128>}, {pipeline_mode = #tpu.pipeline_mode<synchronous>, transform_indices = @transform_2, window_bounds = array<i64: 1, 128>}, {pipeline_mode = #tpu.pipeline_mode<synchronous>, transform_indices = @transform_3, window_bounds = array<i64: 128, 64>}, {pipeline_mode = #tpu.pipeline_mode<synchronous>, transform_indices = @transform_4, window_bounds = array<i64: 1, 64>}, {pipeline_mode = #tpu.pipeline_mode<synchronous>, transform_indices = @transform_5, window_bounds = array<i64: 64, 128>}, {pipeline_mode = #tpu.pipeline_mode<synchronous>, transform_indices = @transform_6, window_bounds = array<i64: 1, 128>}, {transform_indices = @transform_7, window_bounds = array<i64: 8, 128>}]} {
    %c0 = arith.constant 0 : index
    %c0_0 = arith.constant 0 : index
    %0 = vector.load %arg1[%c0, %c0_0] : memref<8x128xf32, #tpu.memory_space<vmem>>, vector<8x128xf32>
    %c0_1 = arith.constant 0 : index
    %c0_2 = arith.constant 0 : index
    %1 = vector.load %arg2[%c0_1, %c0_2] : memref<128x128xf32, #tpu.memory_space<vmem>>, vector<128x128xf32>
    %cst = arith.constant dense<0.000000e+00> : vector<8x128xf32>
    %2 = tpu.matmul %0, %1, %cst {dimension_numbers = #tpu.dot_dimension_numbers<[1], [0], [0], [1], [0, 0, 1, 1], [], []>} : vector<8x128xf32>, vector<128x128xf32>, vector<8x128xf32> -> vector<8x128xf32>
    %c0_3 = arith.constant 0 : index
    %c0_4 = arith.constant 0 : index
    %3 = vector.load %arg3[%c0_3, %c0_4] : memref<1x128xf32, #tpu.memory_space<vmem>>, vector<1x128xf32>
    %4 = vector.broadcast %3 : vector<1x128xf32> to vector<8x128xf32>
    %5 = arith.addf %2, %4 : vector<8x128xf32>
    %cst_5 = arith.constant 0.000000e+00 : f32
    %6 = vector.broadcast %cst_5 : f32 to vector<8x128xf32>
    %7 = arith.maximumf %5, %6 : vector<8x128xf32>
    %c0_6 = arith.constant 0 : index
    %c0_7 = arith.constant 0 : index
    %8 = vector.load %arg4[%c0_6, %c0_7] : memref<128x64xf32, #tpu.memory_space<vmem>>, vector<128x64xf32>
    %cst_8 = arith.constant dense<0.000000e+00> : vector<8x64xf32>
    %9 = tpu.matmul %7, %8, %cst_8 {dimension_numbers = #tpu.dot_dimension_numbers<[1], [0], [0], [1], [0, 0, 1, 1], [], []>} : vector<8x128xf32>, vector<128x64xf32>, vector<8x64xf32> -> vector<8x64xf32>
    %c0_9 = arith.constant 0 : index
    %c0_10 = arith.constant 0 : index
    %10 = vector.load %arg5[%c0_9, %c0_10] : memref<1x64xf32, #tpu.memory_space<vmem>>, vector<1x64xf32>
    %11 = vector.broadcast %10 : vector<1x64xf32> to vector<8x64xf32>
    %12 = arith.addf %9, %11 : vector<8x64xf32>
    %cst_11 = arith.constant 0.000000e+00 : f32
    %13 = vector.broadcast %cst_11 : f32 to vector<8x64xf32>
    %14 = arith.maximumf %12, %13 : vector<8x64xf32>
    %c0_12 = arith.constant 0 : index
    %c0_13 = arith.constant 0 : index
    %15 = vector.load %arg6[%c0_12, %c0_13] : memref<64x128xf32, #tpu.memory_space<vmem>>, vector<64x128xf32>
    %cst_14 = arith.constant dense<0.000000e+00> : vector<8x128xf32>
    %16 = tpu.matmul %14, %15, %cst_14 {dimension_numbers = #tpu.dot_dimension_numbers<[1], [0], [0], [1], [0, 0, 1, 1], [], []>} : vector<8x64xf32>, vector<64x128xf32>, vector<8x128xf32> -> vector<8x128xf32>
    %c0_15 = arith.constant 0 : index
    %c0_16 = arith.constant 0 : index
    %17 = vector.load %arg7[%c0_15, %c0_16] : memref<1x128xf32, #tpu.memory_space<vmem>>, vector<1x128xf32>
    %18 = vector.broadcast %17 : vector<1x128xf32> to vector<8x128xf32>
    %19 = arith.addf %16, %18 : vector<8x128xf32>
    %c0_17 = arith.constant 0 : index
    %c0_18 = arith.constant 0 : index
    %20 = vector.load %arg8[%c0_17, %c0_18] : memref<8x128xf32, #tpu.memory_space<vmem>>, vector<8x128xf32>
    tpu.vector_store %arg8[%c0_17, %c0_18], %19 {strides = array<i32>} : memref<8x128xf32, #tpu.memory_space<vmem>>, vector<8x128xf32>,
    return
  }
  func.func @transform_0(%arg0: i32) -> (i32, i32) {
    %c0_i32 = arith.constant 0 : i32
    %c0_i32_0 = arith.constant 0 : i32
    return %arg0, %c0_i32 : i32, i32
  }
  func.func @transform_1(%arg0: i32) -> (i32, i32) {
    %c0_i32 = arith.constant 0 : i32
    %c0_i32_0 = arith.constant 0 : i32
    %c0_i32_1 = arith.constant 0 : i32
    return %c0_i32, %c0_i32_0 : i32, i32
  }
  func.func @transform_2(%arg0: i32) -> (i32, i32) {
    %c0_i32 = arith.constant 0 : i32
    %c0_i32_0 = arith.constant 0 : i32
    %c0_i32_1 = arith.constant 0 : i32
    return %c0_i32, %c0_i32_0 : i32, i32
  }
  func.func @transform_3(%arg0: i32) -> (i32, i32) {
    %c0_i32 = arith.constant 0 : i32
    %c0_i32_0 = arith.constant 0 : i32
    %c0_i32_1 = arith.constant 0 : i32
    return %c0_i32, %c0_i32_0 : i32, i32
  }
  func.func @transform_4(%arg0: i32) -> (i32, i32) {
    %c0_i32 = arith.constant 0 : i32
    %c0_i32_0 = arith.constant 0 : i32
    %c0_i32_1 = arith.constant 0 : i32
    return %c0_i32, %c0_i32_0 : i32, i32
  }
  func.func @transform_5(%arg0: i32) -> (i32, i32) {
    %c0_i32 = arith.constant 0 : i32
    %c0_i32_0 = arith.constant 0 : i32
    %c0_i32_1 = arith.constant 0 : i32
    return %c0_i32, %c0_i32_0 : i32, i32
  }
  func.func @transform_6(%arg0: i32) -> (i32, i32) {
    %c0_i32 = arith.constant 0 : i32
    %c0_i32_0 = arith.constant 0 : i32
    %c0_i32_1 = arith.constant 0 : i32
    return %c0_i32, %c0_i32_0 : i32, i32
  }
  func.func @transform_7(%arg0: i32) -> (i32, i32) {
    %c0_i32 = arith.constant 0 : i32
    %c0_i32_0 = arith.constant 0 : i32
    return %arg0, %c0_i32 : i32, i32
  }
}

</mosaic_0001>

<llo_original>
// kernel: ppo_forward.1
$region0: #{ppo_forward.1}
  #allocation0 [shape = 'u32[]', space=smem, size = 0x4, offset = 0x4, fixed_abs, tag = 'smem constant byte address 0x4 - core index']
  #allocation1 [shape = 'u32[72,128]{1,0:T(1,128)}', space=vmem, size = 0x9000, scoped, tag = 'internal scratch']
  %s0 = inlined_call_operand.vmem [shape: f32[8,128], index: 0, kind: input, shape index: {}]
  %s1 = inlined_call_operand.vmem [shape: f32[128,128], index: 1, kind: input, shape index: {}]
  %s2 = inlined_call_operand.vmem [shape: f32[1,128], index: 2, kind: input, shape index: {}]
  %s3 = inlined_call_operand.vmem [shape: f32[128,64], index: 3, kind: input, shape index: {}]
  %s4 = inlined_call_operand.vmem [shape: f32[1,64], index: 4, kind: input, shape index: {}]
  %s5 = inlined_call_operand.vmem [shape: f32[64,128], index: 5, kind: input, shape index: {}]
  %s6 = inlined_call_operand.vmem [shape: f32[1,128], index: 6, kind: input, shape index: {}]
  %s7 = inlined_call_operand.vmem [shape: f32[8,128], index: 7, kind: output, shape index: {}]
  %s8 = sld [smem:[#allocation0]]
  $region38: #{ppo_forward.1} parent=0
    _
  %s10 = ssub.s32 1, %s8
  %s11 = scalar_select 0, %s10, %s8
  // Predicated region
  $region2: #{ppo_forward.1} parent=0 // pred_check
    _
  $region3: #{ppo_forward.1} parent=0 // pred_check_branch
    %13 = sbr.rel (0) target = $region5
  $region4: #{ppo_forward.1} parent=0 // pred_region
    _
  $region5: #{ppo_forward.1} parent=0 // pred_fallthru
    _
  // Predicated region
  $region6: #{ppo_forward.1} parent=0 // pred_check
    _
  $region7: #{ppo_forward.1} parent=0 // pred_check_branch
    %15 = sbr.rel (0) target = $region9
  $region8: #{ppo_forward.1} parent=0 // pred_region
    _
  $region9: #{ppo_forward.1} parent=0 // pred_fallthru
    _
  // Predicated region
  $region10: #{ppo_forward.1} parent=0 // pred_check
    _
  $region11: #{ppo_forward.1} parent=0 // pred_check_branch
    %17 = sbr.rel (0) target = $region13
  $region12: #{ppo_forward.1} parent=0 // pred_region
    _
  $region13: #{ppo_forward.1} parent=0 // pred_fallthru
    _
  // Predicated region
  $region14: #{ppo_forward.1} parent=0 // pred_check
    _
  $region15: #{ppo_forward.1} parent=0 // pred_check_branch
    %19 = sbr.rel (0) target = $region17
  $region16: #{ppo_forward.1} parent=0 // pred_region
    _
  $region17: #{ppo_forward.1} parent=0 // pred_fallthru
    _
  // Predicated region
  $region18: #{ppo_forward.1} parent=0 // pred_check
    _
  $region19: #{ppo_forward.1} parent=0 // pred_check_branch
    %21 = sbr.rel (0) target = $region21
  $region20: #{ppo_forward.1} parent=0 // pred_region
    _
  $region21: #{ppo_forward.1} parent=0 // pred_fallthru
    _
  // Predicated region
  $region22: #{ppo_forward.1} parent=0 // pred_check
    _
  $region23: #{ppo_forward.1} parent=0 // pred_check_branch
    %23 = sbr.rel (0) target = $region25
  $region24: #{ppo_forward.1} parent=0 // pred_region
    _
  $region25: #{ppo_forward.1} parent=0 // pred_fallthru
    _
  // Predicated region
  $region26: #{ppo_forward.1} parent=0 // pred_check
    _
  $region27: #{ppo_forward.1} parent=0 // pred_check_branch
    %25 = sbr.rel (0) target = $region29
  $region28: #{ppo_forward.1} parent=0 // pred_region
    _
  $region29: #{ppo_forward.1} parent=0 // pred_fallthru
    _
  %v26 = vld [vmem:[%s0] sm:$0xff]
  %v27 = vld [vmem:[%s1] sm:$0xff]
  %v28 = vld [vmem:[%s1 + $0x8] sm:$0xff]
  %v29 = vld [vmem:[%s1 + $0x10] sm:$0xff]
  %v30 = vld [vmem:[%s1 + $0x18] sm:$0xff]
  %v31 = vld [vmem:[%s1 + $0x20] sm:$0xff]
  %v32 = vld [vmem:[%s1 + $0x28] sm:$0xff]
  %v33 = vld [vmem:[%s1 + $0x30] sm:$0xff]
  %v34 = vld [vmem:[%s1 + $0x38] sm:$0xff]
  %v35 = vld [vmem:[%s1 + $0x40] sm:$0xff]
  %v36 = vld [vmem:[%s1 + $0x48] sm:$0xff]
  %v37 = vld [vmem:[%s1 + $0x50] sm:$0xff]
  %v38 = vld [vmem:[%s1 + $0x58] sm:$0xff]
  %v39 = vld [vmem:[%s1 + $0x60] sm:$0xff]
  %v40 = vld [vmem:[%s1 + $0x68] sm:$0xff]
  %v41 = vld [vmem:[%s1 + $0x70] sm:$0xff]
  %v42 = vld [vmem:[%s1 + $0x78] sm:$0xff]
  %v43 = vld [vmem:[%s2] sm:$0x1]
  %v45 = vperm.slane %v43, 0
  %47 = vmatpush.msra.mxu0 %v42
  %48 = vmatpush.msra.mxu0 %v41
  %49 = vmatpush.msra.mxu0 %v40
  %50 = vmatpush.msra.mxu0 %v39
  %51 = vmatpush.msra.mxu0 %v38
  %52 = vmatpush.msra.mxu0 %v37
  %53 = vmatpush.msra.mxu0 %v36
  %54 = vmatpush.msra.mxu0 %v35
  %55 = vmatpush.msra.mxu0 %v34
  %56 = vmatpush.msra.mxu0 %v33
  %57 = vmatpush.msra.mxu0 %v32
  %58 = vmatpush.msra.mxu0 %v31
  %59 = vmatpush.msra.mxu0 %v30
  %60 = vmatpush.msra.mxu0 %v29
  %61 = vmatpush.msra.mxu0 %v28
  %62 = vmatpush.msra.mxu0 %v27
  %63 = vmatmul.f32.gmra.mxu0 %v26
  %v64 = vpop.f32.mrf.mxu0
  %v65 = vadd.f32 %v45, %v64
  %66 = vdwg.mxu0
  %v67 = vmax.f32 %v65, 0.0
  %v68 = vld [vmem:[%s3] sm:$0xff]
  %v69 = vld [vmem:[%s3 + $0x8] sm:$0xff]
  %v70 = vld [vmem:[%s3 + $0x10] sm:$0xff]
  %v71 = vld [vmem:[%s3 + $0x18] sm:$0xff]
  %v72 = vld [vmem:[%s3 + $0x20] sm:$0xff]
  %v73 = vld [vmem:[%s3 + $0x28] sm:$0xff]
  %v74 = vld [vmem:[%s3 + $0x30] sm:$0xff]
  %v75 = vld [vmem:[%s3 + $0x38] sm:$0xff]
  %v76 = vld [vmem:[%s3 + $0x40] sm:$0xff]
  %v77 = vld [vmem:[%s3 + $0x48] sm:$0xff]
  %v78 = vld [vmem:[%s3 + $0x50] sm:$0xff]
  %v79 = vld [vmem:[%s3 + $0x58] sm:$0xff]
  %v80 = vld [vmem:[%s3 + $0x60] sm:$0xff]
  %v81 = vld [vmem:[%s3 + $0x68] sm:$0xff]
  %v82 = vld [vmem:[%s3 + $0x70] sm:$0xff]
  %v83 = vld [vmem:[%s3 + $0x78] sm:$0xff]
  %v84 = vld [vmem:[%s4] sm:$0x1]
  %v86 = vperm.slane %v84, 0
  %88 = vmatpush.msra.mxu0 %v83
  %89 = vmatpush.msra.mxu0 %v82
  %90 = vmatpush.msra.mxu0 %v81
  %91 = vmatpush.msra.mxu0 %v80
  %92 = vmatpush.msra.mxu0 %v79
  %93 = vmatpush.msra.mxu0 %v78
  %94 = vmatpush.msra.mxu0 %v77
  %95 = vmatpush.msra.mxu0 %v76
  %96 = vmatpush.msra.mxu0 %v75
  %97 = vmatpush.msra.mxu0 %v74
  %98 = vmatpush.msra.mxu0 %v73
  %99 = vmatpush.msra.mxu0 %v72
  %100 = vmatpush.msra.mxu0 %v71
  %101 = vmatpush.msra.mxu0 %v70
  %102 = vmatpush.msra.mxu0 %v69
  %103 = vmatpush.msra.mxu0 %v68
  %104 = vmatmul.f32.gmra.mxu0 %v67
  %v105 = vpop.f32.mrf.mxu0
  %v106 = vadd.f32 %v86, %v105
  %107 = vdwg.mxu0
  %v108 = vmax.f32 %v106, 0.0
  %v109 = vld [vmem:[%s5] sm:$0xff]
  %v110 = vld [vmem:[%s5 + $0x8] sm:$0xff]
  %v111 = vld [vmem:[%s5 + $0x10] sm:$0xff]
  %v112 = vld [vmem:[%s5 + $0x18] sm:$0xff]
  %v113 = vld [vmem:[%s5 + $0x20] sm:$0xff]
  %v114 = vld [vmem:[%s5 + $0x28] sm:$0xff]
  %v115 = vld [vmem:[%s5 + $0x30] sm:$0xff]
  %v116 = vld [vmem:[%s5 + $0x38] sm:$0xff]
  %v117 = vld [vmem:[%s6] sm:$0x1]
  %v119 = vperm.slane %v117, 0
  %vm121 = vcmask 523264
  %v123 = vsel %vm121, %v108, 0
  %125 = vmatpush.msra.mxu0 0.0
  %126 = vmatpush.msra.mxu0 0.0
  %127 = vmatpush.msra.mxu0 0.0
  %128 = vmatpush.msra.mxu0 0.0
  %129 = vmatpush.msra.mxu0 0.0
  %130 = vmatpush.msra.mxu0 0.0
  %131 = vmatpush.msra.mxu0 0.0
  %132 = vmatpush.msra.mxu0 0.0
  %133 = vmatpush.msra.mxu0 %v116
  %134 = vmatpush.msra.mxu0 %v115
  %135 = vmatpush.msra.mxu0 %v114
  %136 = vmatpush.msra.mxu0 %v113
  %137 = vmatpush.msra.mxu0 %v112
  %138 = vmatpush.msra.mxu0 %v111
  %139 = vmatpush.msra.mxu0 %v110
  %140 = vmatpush.msra.mxu0 %v109
  %141 = vmatmul.f32.gmra.mxu0 %v123
  %v142 = vpop.f32.mrf.mxu0
  %v143 = vadd.f32 %v119, %v142
  %144 = vdwg.mxu0
  %145 = vst [vmem:[%s7] sm:$0xff] %v143
  // Predicated region
  $region30: #{ppo_forward.1} parent=0 // pred_check
    _
  $region31: #{ppo_forward.1} parent=0 // pred_check_branch
    %147 = sbr.rel (0) target = $region33
  $region32: #{ppo_forward.1} parent=0 // pred_region
    _
  $region33: #{ppo_forward.1} parent=0 // pred_fallthru
    _
  // Predicated region
  $region34: #{ppo_forward.1} parent=0 // pred_check
    _
  $region35: #{ppo_forward.1} parent=0 // pred_check_branch
    %149 = sbr.rel (0) target = $region37
  $region36: #{ppo_forward.1} parent=0 // pred_region
    _
  $region37: #{ppo_forward.1} parent=0 // pred_fallthru
    _

</llo_original>
